<compile_context>
chip_gen: v5e
topology: v5e:2x2
jax: 0.10.0
libtpu: 0.0.40
codegen_flags: <defaults>
</compile_context>

<pallas_src>
import jax
import jax.numpy as jnp
from jax import lax
from jax.experimental import pallas as pl
from jax.experimental.pallas import tpu as pltpu


def _round_up(x, m):
    return (x + m - 1) // m * m


def _embedding_onehot_kernel(ids_ref, emb_ref, out_ref):
    # ids_ref : VMEM int32 [bt, 1]    token ids for this block
    # emb_ref : VMEM [Vpad, H]        full (row-padded) embedding table
    # out_ref : VMEM [bt, H]          gathered embeddings for this block
    bt = out_ref.shape[0]
    vpad = emb_ref.shape[0]

    ids = ids_ref[...]                                            # [bt, 1]
    col = lax.broadcasted_iota(jnp.int32, (bt, vpad), 1)          # [bt, Vpad]
    onehot = (col == ids).astype(emb_ref.dtype)                   # [bt, Vpad]

    # One-hot gather on the MXU.  HIGHEST precision keeps the f32 table rows
    # bit-exact (multiplying by 0/1 and summing a single nonzero term).
    gathered = jnp.dot(
        onehot,
        emb_ref[...],
        preferred_element_type=jnp.float32,
        precision=lax.Precision.HIGHEST,
    )
    out_ref[...] = gathered.astype(out_ref.dtype)


def ribonanzanet_embeddings(input_ids=None, inputs_embeds=None, *,
                            embedding_table=None, block_tokens=1024):
    """Pallas implementation of RibonanzaNetEmbeddings.forward."""
    if inputs_embeds is not None:
        # Module semantics: provided embeddings are returned unchanged.
        return inputs_embeds
    if input_ids is None:
        raise ValueError("Either input_ids or inputs_embeds must be provided.")
    if embedding_table is None:
        raise ValueError("embedding_table is required when input_ids is given.")

    V, H = embedding_table.shape
    dtype = embedding_table.dtype

    # Sublane multiple for the output tile: 8 for f32, 16 for bf16, 32 for int8.
    sub = max(8, 32 // jnp.dtype(dtype).itemsize)

    batch_shape = input_ids.shape
    ids_flat = input_ids.reshape(-1).astype(jnp.int32)
    T = ids_flat.shape[0]

    # Token-block size: large (amortizes per-grid-step overhead), sublane
    # aligned, capped at the (padded) token count.
    bt = min(_round_up(block_tokens, sub), _round_up(T, sub))
    # v7x megacore: keep >= 2 grid steps when there is enough work so both
    # TensorCores get a share under "parallel" semantics.
    if _round_up(T, sub) >= 2 * sub:
        bt = min(bt, _round_up(pl.cdiv(T, 2), sub))

    T_pad = _round_up(T, bt)
    if T_pad != T:
        # Padded slots gather row 0 (the padding row); sliced away below.
        ids_flat = jnp.pad(ids_flat, (0, T_pad - T))
    ids2d = ids_flat.reshape(T_pad, 1)

    # Pad the table rows to a lane-aligned contraction dim for the one-hot
    # matmul.  Padded rows are zero and unreachable for in-range ids.
    Vpad = _round_up(V, 128)
    table = embedding_table
    if Vpad != V:
        table = jnp.pad(embedding_table, ((0, Vpad - V), (0, 0)))

    grid = (T_pad // bt,)

    out = pl.pallas_call(
        _embedding_onehot_kernel,
        grid=grid,
        in_specs=[
            # Token ids: [bt, 1] VMEM block per grid step.
            pl.BlockSpec((bt, 1), lambda i: (i, 0)),
            # Full table, constant block index -> fetched once, reused.
            pl.BlockSpec((Vpad, H), lambda i: (0, 0)),
        ],
        # Lane-dense [bt, H] output tile (last dim is the full hidden size).
        out_specs=pl.BlockSpec((bt, H), lambda i: (i, 0)),
        out_shape=jax.ShapeDtypeStruct((T_pad, H), dtype),
        compiler_params=pltpu.CompilerParams(
            dimension_semantics=("parallel",)),
    )(ids2d, table)

    if T_pad != T:
        out = out[:T]
    return out.reshape(*batch_shape, H)


if __name__ == "__main__":
    # Small config consistent with RibonanzaNet: vocab=26, hidden=128, pad_id=0.
    B, S = 2, 8
    VOCAB, HIDDEN, PAD_ID = 26, 128, 0

    key = jax.random.PRNGKey(0)
    k_emb, k_ids = jax.random.split(key)

    table = jax.random.normal(k_emb, (VOCAB, HIDDEN), jnp.float32)
    # nn.Embedding(padding_idx=PAD_ID) zero-initializes the padding row.
    table = table.at[PAD_ID].set(0.0)

    input_ids = jax.random.randint(k_ids, (B, S), 0, VOCAB, jnp.int32)
    input_ids = input_ids.at[:, -2:].set(PAD_ID)   # include explicit pad tokens

    out = ribonanzanet_embeddings(input_ids=input_ids, embedding_table=table)
    out = jax.block_until_ready(out)

    ref = jnp.take(table, input_ids, axis=0)
    assert out.shape == (B, S, HIDDEN)
    assert jnp.allclose(out, ref, atol=0.0, rtol=0.0), "gather mismatch"

    # inputs_embeds pass-through path of the module.
    passthrough = ribonanzanet_embeddings(inputs_embeds=ref, embedding_table=table)
    assert passthrough is ref

    print("KERNEL_OK")
</pallas_src>

<mosaic_0001>
module attributes {stable_mosaic.version = 11 : i64} {
  func.func @_embedding_onehot_kernel(%arg0: i32, %arg1: memref<8x1xi32, #tpu.memory_space<vmem>>, %arg2: memref<128x128xf32, #tpu.memory_space<vmem>>, %arg3: memref<8x128xf32, #tpu.memory_space<vmem>>) attributes {dimension_semantics = [#tpu.dimension_semantics<parallel>], iteration_bounds = array<i64: 2>, scalar_prefetch = 0 : i64, scratch_operands = 0 : i64, tpu.core_type = #tpu.core_type<tc>, window_params = [{transform_indices = @transform_0, window_bounds = array<i64: 8, 1>}, {pipeline_mode = #tpu.pipeline_mode<synchronous>, transform_indices = @transform_1, window_bounds = array<i64: 128, 128>}, {transform_indices = @transform_2, window_bounds = array<i64: 8, 128>}]} {
    %c0 = arith.constant 0 : index
    %c0_0 = arith.constant 0 : index
    %0 = vector.load %arg1[%c0, %c0_0] : memref<8x1xi32, #tpu.memory_space<vmem>>, vector<8x1xi32>
    %1 = tpu.iota {dimensions = array<i32: 1>} : vector<8x128xi32>
    %2 = vector.broadcast %0 : vector<8x1xi32> to vector<8x128xi32>
    %3 = arith.cmpi eq, %1, %2 : vector<8x128xi32>
    %4 = arith.extui %3 : vector<8x128xi1> to vector<8x128xi32>
    %5 = arith.sitofp %4 : vector<8x128xi32> to vector<8x128xf32>
    %c0_1 = arith.constant 0 : index
    %c0_2 = arith.constant 0 : index
    %6 = vector.load %arg2[%c0_1, %c0_2] : memref<128x128xf32, #tpu.memory_space<vmem>>, vector<128x128xf32>
    %cst = arith.constant dense<0.000000e+00> : vector<8x128xf32>
    %7 = tpu.matmul %5, %6, %cst {dimension_numbers = #tpu.dot_dimension_numbers<[1], [0], [0], [1], [0, 0, 1, 1], [], []>, precision = #tpu.contract_precision<fp32>} : vector<8x128xf32>, vector<128x128xf32>, vector<8x128xf32> -> vector<8x128xf32>
    %c0_3 = arith.constant 0 : index
    %c0_4 = arith.constant 0 : index
    %8 = vector.load %arg3[%c0_3, %c0_4] : memref<8x128xf32, #tpu.memory_space<vmem>>, vector<8x128xf32>
    tpu.vector_store %arg3[%c0_3, %c0_4], %7 {strides = array<i32>} : memref<8x128xf32, #tpu.memory_space<vmem>>, vector<8x128xf32>,
    return
  }
  func.func @transform_0(%arg0: i32) -> (i32, i32) {
    %c0_i32 = arith.constant 0 : i32
    %c0_i32_0 = arith.constant 0 : i32
    return %arg0, %c0_i32 : i32, i32
  }
  func.func @transform_1(%arg0: i32) -> (i32, i32) {
    %c0_i32 = arith.constant 0 : i32
    %c0_i32_0 = arith.constant 0 : i32
    %c0_i32_1 = arith.constant 0 : i32
    return %c0_i32, %c0_i32_0 : i32, i32
  }
  func.func @transform_2(%arg0: i32) -> (i32, i32) {
    %c0_i32 = arith.constant 0 : i32
    %c0_i32_0 = arith.constant 0 : i32
    return %arg0, %c0_i32 : i32, i32
  }
}

</mosaic_0001>

<llo_original>
// kernel: tpu_custom_call.1
$region0: #{tpu_custom_call.1}
  #allocation0 [shape = 'u32[]', space=smem, size = 0x4, offset = 0x4, fixed_abs, tag = 'smem constant byte address 0x4 - core index']
  #allocation1 [shape = 'u32[72,128]{1,0:T(1,128)}', space=vmem, size = 0x9000, scoped, tag = 'internal scratch']
  %s0 = inlined_call_operand.vmem [shape: s32[16,1], index: 0, kind: input, shape index: {}]
  %s1 = inlined_call_operand.hbm [shape: f32[128,128], index: 1, kind: input, shape index: {}]
  %s2 = inlined_call_operand.hbm [shape: f32[16,128], index: 2, kind: output, shape index: {}]
  %s3 = sld [smem:[#allocation0]]
  $region45: #{tpu_custom_call.1} parent=0
    _
  %s5 = ssub.s32 1, %s3
  %s6 = scalar_select 0, %s5, %s3
  $region1: #{tpu_custom_call.1} parent=0
    #allocation2 [shape = 'u8[65536]{0}', space=vmem, size = 0x10000, scoped, tag = 'input window, operand 1, single buffered']
    #allocation3 [shape = 's32[2]{0}', space=sflag, size = 0x8, scoped, tag = 'scoped memory for tpu_custom_call.1']
    #allocation4 [shape = 's32[2]{0}', space=sflag, size = 0x8, scoped, tag = 'scoped memory for tpu_custom_call.1']
    #allocation5 [shape = 'u8[8192]{0}', space=vmem, size = 0x2000, scoped, tag = 'output window, operand 0']
    %7 = vsyncpa [#allocation3], 0
    %8 = vsyncpa [#allocation4], 0
    %s9 = scalar_lea.sflag [#allocation4], 1
    %10 = vsyncpa %s9, 0
    loop: start=0, step=1, limit=4
    $region2: #{tpu_custom_call.1} parent=1 // loop_pre_header
      _
    $region3: #{tpu_custom_call.1} parent=1 // loop_header
      %s12 = sphi 0, %s16
      %p13 = scmp.ge.s32.totalorder %s12, 4
      %s22 = sphi 0, %s24
      %s25 = sphi 0, %s22
      %s26 = sphi 0, %s25
      %s42 = sphi 0, %s26
      %s46 = sphi 0, %s46
      %s48 = sphi 0, %s46
      %s49 = sphi 0, %s48
      %s63 = sphi 0, %s49
      %s69 = sphi 0, %s71
      %s72 = sphi 0, %s69
      %s73 = sphi 0, %s72
      %s89 = sphi 0, %s73
    $region4: #{tpu_custom_call.1} parent=1 // loop_header_branch
      %15 = sbr.rel (%p13) target = $region8
    $region5: #{tpu_custom_call.1} parent=1 // loop_body
      %s17 = ssub.s32 %s12, 1
      %s18 = ssub.s32 %s12, 2
      %s19 = sadd.s32 %s12, 1
      %s20 = ssub.s32 %s12, %s19
      %p21 = scmp.eq.s32.totalorder %s20, 0
      %s23 = sadd.s32 %s22, 1
      %s24 = scalar_select %p21, %s22, %s23
      %p27 = pneg %p21
      %p28 = scmp.eq.s32.totalorder %s12, 1
      %p29 = por %p27, %p28
      %p30 = scmp.ne.s32.totalorder %s22, %s25
      %p31 = scmp.eq.s32.totalorder %s12, 0
      %p32 = por %p30, %p31
      %p33 = scmp.ne.s32.totalorder %s22, %s25
      %p34 = scmp.eq.s32.totalorder %s17, 1
      %p35 = por %p33, %p34
      %p36 = scmp.ne.s32.totalorder %s25, %s26
      %p37 = scmp.eq.s32.totalorder %s17, 0
      %p38 = por %p36, %p37
      %p39 = scmp.ne.s32.totalorder %s25, %s26
      %p40 = scmp.eq.s32.totalorder %s18, 1
      %p41 = por %p39, %p40
      %p43 = scmp.ne.s32.totalorder %s26, %s42
      %p44 = scmp.eq.s32.totalorder %s18, 0
      %p45 = por %p43, %p44
      %s47 = sadd.s32 %s46, 1
      %p50 = scmp.eq.s32.totalorder %s12, 1
      %p51 = scmp.ne.s32.totalorder %s46, %s48
      %p52 = scmp.eq.s32.totalorder %s12, 0
      %p53 = por %p51, %p52
      %p54 = scmp.ne.s32.totalorder %s46, %s48
      %p55 = scmp.eq.s32.totalorder %s17, 1
      %p56 = por %p54, %p55
      %p57 = scmp.ne.s32.totalorder %s48, %s49
      %p58 = scmp.eq.s32.totalorder %s17, 0
      %p59 = por %p57, %p58
      %p60 = scmp.ne.s32.totalorder %s48, %s49
      %p61 = scmp.eq.s32.totalorder %s18, 1
      %p62 = por %p60, %p61
      %p64 = scmp.ne.s32.totalorder %s49, %s63
      %p65 = scmp.eq.s32.totalorder %s18, 0
      %p66 = por %p64, %p65
      %s67 = ssub.s32 %s12, %s19
      %p68 = scmp.eq.s32.totalorder %s67, 0
      %s70 = sadd.s32 %s69, 1
      %s71 = scalar_select %p68, %s69, %s70
      %p74 = pneg %p68
      %p75 = scmp.eq.s32.totalorder %s12, 1
      %p76 = por %p74, %p75
      %p77 = scmp.ne.s32.totalorder %s69, %s72
      %p78 = scmp.eq.s32.totalorder %s12, 0
      %p79 = por %p77, %p78
      %p80 = scmp.ne.s32.totalorder %s69, %s72
      %p81 = scmp.eq.s32.totalorder %s17, 1
      %p82 = por %p80, %p81
      %p83 = scmp.ne.s32.totalorder %s72, %s73
      %p84 = scmp.eq.s32.totalorder %s17, 0
      %p85 = por %p83, %p84
      %p86 = scmp.ne.s32.totalorder %s72, %s73
      %p87 = scmp.eq.s32.totalorder %s18, 1
      %p88 = por %p86, %p87
      %p90 = scmp.ne.s32.totalorder %s73, %s89
      %p91 = scmp.eq.s32.totalorder %s18, 0
      %p92 = por %p90, %p91
      %p93 = scmp.le.s32.totalorder 1, %s12
      %p94 = scmp.lt.s32.totalorder %s12, 3
      %p95 = pnand %p93, %p94
      %p96 = pneg %p95
      // Predicated region
      $region9: #{tpu_custom_call.1} parent=5 // pred_check
        _
      $region10: #{tpu_custom_call.1} parent=5 // pred_check_branch
        %98 = sbr.rel (%p95) target = $region12
      $region11: #{tpu_custom_call.1} parent=5 // pred_region
        %s99 = ssub.s32 %s12, 1
        // Predicated region
        $region13: #{tpu_custom_call.1} parent=11 // pred_check
          %p100 = pneg %p59
        $region14: #{tpu_custom_call.1} parent=11 // pred_check_branch
          %102 = sbr.rel (%p100) target = $region16
        $region15: #{tpu_custom_call.1} parent=11 // pred_region
          %104 = vsyncadd [#allocation3], 0
          %s105 = sshll.u32 %s1, 4
          %s106 = int_to_ptr.hbm [resolvable:$true] %s105
          %s107 = sshll.u32 [#allocation2], 4
          %s108 = int_to_ptr.vmem [resolvable:$true] %s107
          %113 = dma.hbm_to_vmem [thread:$0]  %s106, 2048, %s108, [#allocation3], 128, 128, 8
        $region16: #{tpu_custom_call.1} parent=11 // pred_fallthru
          _
      $region12: #{tpu_custom_call.1} parent=5 // pred_fallthru
        _
      %p114 = scmp.lt.s32.totalorder %s12, 2
      // Predicated region
      $region17: #{tpu_custom_call.1} parent=5 // pred_check
        %p115 = pneg %p114
      $region18: #{tpu_custom_call.1} parent=5 // pred_check_branch
        %117 = sbr.rel (%p115) target = $region20
      $region19: #{tpu_custom_call.1} parent=5 // pred_region
        // Predicated region
        $region21: #{tpu_custom_call.1} parent=19 // pred_check
          %p118 = pneg %p32
        $region22: #{tpu_custom_call.1} parent=19 // pred_check_branch
          %120 = sbr.rel (%p118) target = $region24
        $region23: #{tpu_custom_call.1} parent=19 // pred_region
          %p121 = scmp.lt.s32.totalorder %s12, 1
          %s122 = scalar_select %p121, %s12, 1
          %s123 = smul.addr %s122, 8
          %s124 = scalar_lea.vmem %s0, %s123
        $region24: #{tpu_custom_call.1} parent=19 // pred_fallthru
          _
      $region20: #{tpu_custom_call.1} parent=5 // pred_fallthru
        _
      %p125 = scmp.le.s32.totalorder 1, %s12
      %p126 = scmp.lt.s32.totalorder %s12, 3
      %p127 = pnand %p125, %p126
      %p128 = pneg %p127
      // Predicated region
      $region25: #{tpu_custom_call.1} parent=5 // pred_check
        _
      $region26: #{tpu_custom_call.1} parent=5 // pred_check_branch
        %130 = sbr.rel (%p127) target = $region28
      $region27: #{tpu_custom_call.1} parent=5 // pred_region
        %s131 = ssub.s32 %s12, 1
        // Predicated region
        $region29: #{tpu_custom_call.1} parent=27 // pred_check
          %p132 = pneg %p59
        $region30: #{tpu_custom_call.1} parent=27 // pred_check_branch
          %134 = sbr.rel (%p132) target = $region32
        $region31: #{tpu_custom_call.1} parent=27 // pred_region
          %136 = dma.done [#allocation3], 2048
        $region32: #{tpu_custom_call.1} parent=27 // pred_fallthru
          _
        %p137 = scmp.lt.s32.totalorder %s17, 1
        %s138 = scalar_select %p137, %s17, 1
        %s139 = smul.addr %s138, 8
        %s140 = scalar_lea.vmem %s0, %s139
        %p141 = pneg %p38
        %p142 = pneg %p35
        %p143 = pneg %p59
        %p144 = pneg %p56
        %p145 = pneg %p85
        %p146 = pneg %p82
        %s147 = sand.u32 %s72, 1
        %s148 = scalar_lea.sflag [#allocation4], %s147
        %s149 = sand.u32 %s72, 1
        %s150 = smul.addr %s149, 8
        %s151 = scalar_lea.vmem [#allocation5], %s150
        %p152 = scmp.lt.s32.totalorder %s17, 1
        %s153 = scalar_select %p152, %s17, 1
        %s154 = smul.addr %s153, 8
        %s155 = scalar_lea.vmem %s0, %s154
        %v156 = vld [vmem:[%s155] sm:$0xff]
        %v157 = vlaneseq
        %v158 = vand.u32 %v157, 127
        %159 = vset.pattern.permute.xlu0 0
        %160 = vperm.xlu0 %159, %v156
        %v161 = vpop.permute.xlu0 %160
        %vm162 = vcmp.eq.s32.totalorder %v158, %v161
        %v163 = vsel %vm162, 1, 0
        %v164 = vcvt.s32.f32 %v163
        %v165 = vld [vmem:[#allocation2] sm:$0xff]
        %v166 = vld [vmem:[#allocation2 + $0x8] sm:$0xff]
        %v167 = vld [vmem:[#allocation2 + $0x10] sm:$0xff]
        %v168 = vld [vmem:[#allocation2 + $0x18] sm:$0xff]
        %v169 = vld [vmem:[#allocation2 + $0x20] sm:$0xff]
        %v170 = vld [vmem:[#allocation2 + $0x28] sm:$0xff]
        %v171 = vld [vmem:[#allocation2 + $0x30] sm:$0xff]
        %v172 = vld [vmem:[#allocation2 + $0x38] sm:$0xff]
        %v173 = vld [vmem:[#allocation2 + $0x40] sm:$0xff]
        %v174 = vld [vmem:[#allocation2 + $0x48] sm:$0xff]
        %v175 = vld [vmem:[#allocation2 + $0x50] sm:$0xff]
        %v176 = vld [vmem:[#allocation2 + $0x58] sm:$0xff]
        %v177 = vld [vmem:[#allocation2 + $0x60] sm:$0xff]
        %v178 = vld [vmem:[#allocation2 + $0x68] sm:$0xff]
        %v179 = vld [vmem:[#allocation2 + $0x70] sm:$0xff]
        %v180 = vld [vmem:[#allocation2 + $0x78] sm:$0xff]
        %v181 = vand.u32 %v180, 4294901760
        %182 = vmatpush.msra.mxu0 %v181
        %v183 = vand.u32 %v179, 4294901760
        %184 = vmatpush.msra.mxu0 %v183
        %v185 = vand.u32 %v178, 4294901760
        %186 = vmatpush.msra.mxu0 %v185
        %v187 = vand.u32 %v177, 4294901760
        %188 = vmatpush.msra.mxu0 %v187
        %v189 = vand.u32 %v176, 4294901760
        %190 = vmatpush.msra.mxu0 %v189
        %v191 = vand.u32 %v175, 4294901760
        %192 = vmatpush.msra.mxu0 %v191
        %v193 = vand.u32 %v174, 4294901760
        %194 = vmatpush.msra.mxu0 %v193
        %v195 = vand.u32 %v173, 4294901760
        %196 = vmatpush.msra.mxu0 %v195
        %v197 = vand.u32 %v172, 4294901760
        %198 = vmatpush.msra.mxu0 %v197
        %v199 = vand.u32 %v171, 4294901760
        %200 = vmatpush.msra.mxu0 %v199
        %v201 = vand.u32 %v170, 4294901760
        %202 = vmatpush.msra.mxu0 %v201
        %v203 = vand.u32 %v169, 4294901760
        %204 = vmatpush.msra.mxu0 %v203
        %v205 = vand.u32 %v168, 4294901760
        %206 = vmatpush.msra.mxu0 %v205
        %v207 = vand.u32 %v167, 4294901760
        %208 = vmatpush.msra.mxu0 %v207
        %v209 = vand.u32 %v166, 4294901760
        %210 = vmatpush.msra.mxu0 %v209
        %v211 = vand.u32 %v165, 4294901760
        %212 = vmatpush.msra.mxu0 %v211
        %v213 = vand.u32 %v164, 4294901760
        %v214 = vsub.f32 %v164, %v213
        %v215 = vand.u32 %v214, 4294901760
        %v216 = vsub.f32 %v214, %v215
        %v217 = vand.u32 %v216, 4294901760
        %218 = vmatmul.f32.gmra.mxu0 %v217
        %v219 = vpop.f32.mrf.mxu0
        %v220 = vadd.f32 0.0, %v219
        %221 = vdwg.mxu0
        %v222 = vand.u32 %v180, 4294901760
        %v223 = vsub.f32 %v180, %v222
        %v224 = vand.u32 %v223, 4294901760
        %v225 = vsub.f32 %v223, %v224
        %v226 = vand.u32 %v225, 4294901760
        %227 = vmatpush.msra.mxu0 %v226
        %v228 = vand.u32 %v179, 4294901760
        %v229 = vsub.f32 %v179, %v228
        %v230 = vand.u32 %v229, 4294901760
        %v231 = vsub.f32 %v229, %v230
        %v232 = vand.u32 %v231, 4294901760
        %233 = vmatpush.msra.mxu0 %v232
        %v234 = vand.u32 %v178, 4294901760
        %v235 = vsub.f32 %v178, %v234
        %v236 = vand.u32 %v235, 4294901760
        %v237 = vsub.f32 %v235, %v236
        %v238 = vand.u32 %v237, 4294901760
        %239 = vmatpush.msra.mxu0 %v238
        %v240 = vand.u32 %v177, 4294901760
        %v241 = vsub.f32 %v177, %v240
        %v242 = vand.u32 %v241, 4294901760
        %v243 = vsub.f32 %v241, %v242
        %v244 = vand.u32 %v243, 4294901760
        %245 = vmatpush.msra.mxu0 %v244
        %v246 = vand.u32 %v176, 4294901760
        %v247 = vsub.f32 %v176, %v246
        %v248 = vand.u32 %v247, 4294901760
        %v249 = vsub.f32 %v247, %v248
        %v250 = vand.u32 %v249, 4294901760
        %251 = vmatpush.msra.mxu0 %v250
        %v252 = vand.u32 %v175, 4294901760
        %v253 = vsub.f32 %v175, %v252
        %v254 = vand.u32 %v253, 4294901760
        %v255 = vsub.f32 %v253, %v254
        %v256 = vand.u32 %v255, 4294901760
        %257 = vmatpush.msra.mxu0 %v256
        %v258 = vand.u32 %v174, 4294901760
        %v259 = vsub.f32 %v174, %v258
        %v260 = vand.u32 %v259, 4294901760
        %v261 = vsub.f32 %v259, %v260
        %v262 = vand.u32 %v261, 4294901760
        %263 = vmatpush.msra.mxu0 %v262
        %v264 = vand.u32 %v173, 4294901760
        %v265 = vsub.f32 %v173, %v264
        %v266 = vand.u32 %v265, 4294901760
        %v267 = vsub.f32 %v265, %v266
        %v268 = vand.u32 %v267, 4294901760
        %269 = vmatpush.msra.mxu0 %v268
        %v270 = vand.u32 %v172, 4294901760
        %v271 = vsub.f32 %v172, %v270
        %v272 = vand.u32 %v271, 4294901760
        %v273 = vsub.f32 %v271, %v272
        %v274 = vand.u32 %v273, 4294901760
        %275 = vmatpush.msra.mxu0 %v274
        %v276 = vand.u32 %v171, 4294901760
        %v277 = vsub.f32 %v171, %v276
        %v278 = vand.u32 %v277, 4294901760
        %v279 = vsub.f32 %v277, %v278
        %v280 = vand.u32 %v279, 4294901760
        %281 = vmatpush.msra.mxu0 %v280
        %v282 = vand.u32 %v170, 4294901760
        %v283 = vsub.f32 %v170, %v282
        %v284 = vand.u32 %v283, 4294901760
        %v285 = vsub.f32 %v283, %v284
        %v286 = vand.u32 %v285, 4294901760
        %287 = vmatpush.msra.mxu0 %v286
        %v288 = vand.u32 %v169, 4294901760
        %v289 = vsub.f32 %v169, %v288
        %v290 = vand.u32 %v289, 4294901760
        %v291 = vsub.f32 %v289, %v290
        %v292 = vand.u32 %v291, 4294901760
        %293 = vmatpush.msra.mxu0 %v292
        %v294 = vand.u32 %v168, 4294901760
        %v295 = vsub.f32 %v168, %v294
        %v296 = vand.u32 %v295, 4294901760
        %v297 = vsub.f32 %v295, %v296
        %v298 = vand.u32 %v297, 4294901760
        %299 = vmatpush.msra.mxu0 %v298
        %v300 = vand.u32 %v167, 4294901760
        %v301 = vsub.f32 %v167, %v300
        %v302 = vand.u32 %v301, 4294901760
        %v303 = vsub.f32 %v301, %v302
        %v304 = vand.u32 %v303, 4294901760
        %305 = vmatpush.msra.mxu0 %v304
        %v306 = vand.u32 %v166, 4294901760
        %v307 = vsub.f32 %v166, %v306
        %v308 = vand.u32 %v307, 4294901760
        %v309 = vsub.f32 %v307, %v308
        %v310 = vand.u32 %v309, 4294901760
        %311 = vmatpush.msra.mxu0 %v310
        %v312 = vand.u32 %v165, 4294901760
        %v313 = vsub.f32 %v165, %v312
        %v314 = vand.u32 %v313, 4294901760
        %v315 = vsub.f32 %v313, %v314
        %v316 = vand.u32 %v315, 4294901760
        %317 = vmatpush.msra.mxu0 %v316
        %v318 = vand.u32 %v164, 4294901760
        %319 = vmatmul.f32.gmra.mxu0 %v318
        %v320 = vpop.f32.mrf.mxu0
        %v321 = vadd.f32 %v220, %v320
        %322 = vdwg.mxu0
        %v323 = vand.u32 %v180, 4294901760
        %v324 = vsub.f32 %v180, %v323
        %325 = vmatpush.msra.mxu0 %v324
        %v326 = vand.u32 %v179, 4294901760
        %v327 = vsub.f32 %v179, %v326
        %328 = vmatpush.msra.mxu0 %v327
        %v329 = vand.u32 %v178, 4294901760
        %v330 = vsub.f32 %v178, %v329
        %331 = vmatpush.msra.mxu0 %v330
        %v332 = vand.u32 %v177, 4294901760
        %v333 = vsub.f32 %v177, %v332
        %334 = vmatpush.msra.mxu0 %v333
        %v335 = vand.u32 %v176, 4294901760
        %v336 = vsub.f32 %v176, %v335
        %337 = vmatpush.msra.mxu0 %v336
        %v338 = vand.u32 %v175, 4294901760
        %v339 = vsub.f32 %v175, %v338
        %340 = vmatpush.msra.mxu0 %v339
        %v341 = vand.u32 %v174, 4294901760
        %v342 = vsub.f32 %v174, %v341
        %343 = vmatpush.msra.mxu0 %v342
        %v344 = vand.u32 %v173, 4294901760
        %v345 = vsub.f32 %v173, %v344
        %346 = vmatpush.msra.mxu0 %v345
        %v347 = vand.u32 %v172, 4294901760
        %v348 = vsub.f32 %v172, %v347
        %349 = vmatpush.msra.mxu0 %v348
        %v350 = vand.u32 %v171, 4294901760
        %v351 = vsub.f32 %v171, %v350
        %352 = vmatpush.msra.mxu0 %v351
        %v353 = vand.u32 %v170, 4294901760
        %v354 = vsub.f32 %v170, %v353
        %355 = vmatpush.msra.mxu0 %v354
        %v356 = vand.u32 %v169, 4294901760
        %v357 = vsub.f32 %v169, %v356
        %358 = vmatpush.msra.mxu0 %v357
        %v359 = vand.u32 %v168, 4294901760
        %v360 = vsub.f32 %v168, %v359
        %361 = vmatpush.msra.mxu0 %v360
        %v362 = vand.u32 %v167, 4294901760
        %v363 = vsub.f32 %v167, %v362
        %364 = vmatpush.msra.mxu0 %v363
        %v365 = vand.u32 %v166, 4294901760
        %v366 = vsub.f32 %v166, %v365
        %367 = vmatpush.msra.mxu0 %v366
        %v368 = vand.u32 %v165, 4294901760
        %v369 = vsub.f32 %v165, %v368
        %370 = vmatpush.msra.mxu0 %v369
        %v371 = vand.u32 %v164, 4294901760
        %v372 = vsub.f32 %v164, %v371
        %373 = vmatmul.f32.gmra.mxu0 %v372
        %v374 = vpop.f32.mrf.mxu0
        %v375 = vadd.f32 %v321, %v374
        %376 = vdwg.mxu0
        %v377 = vand.u32 %v180, 4294901760
        %378 = vmatpush.msra.mxu0 %v377
        %v379 = vand.u32 %v179, 4294901760
        %380 = vmatpush.msra.mxu0 %v379
        %v381 = vand.u32 %v178, 4294901760
        %382 = vmatpush.msra.mxu0 %v381
        %v383 = vand.u32 %v177, 4294901760
        %384 = vmatpush.msra.mxu0 %v383
        %v385 = vand.u32 %v176, 4294901760
        %386 = vmatpush.msra.mxu0 %v385
        %v387 = vand.u32 %v175, 4294901760
        %388 = vmatpush.msra.mxu0 %v387
        %v389 = vand.u32 %v174, 4294901760
        %390 = vmatpush.msra.mxu0 %v389
        %v391 = vand.u32 %v173, 4294901760
        %392 = vmatpush.msra.mxu0 %v391
        %v393 = vand.u32 %v172, 4294901760
        %394 = vmatpush.msra.mxu0 %v393
        %v395 = vand.u32 %v171, 4294901760
        %396 = vmatpush.msra.mxu0 %v395
        %v397 = vand.u32 %v170, 4294901760
        %398 = vmatpush.msra.mxu0 %v397
        %v399 = vand.u32 %v169, 4294901760
        %400 = vmatpush.msra.mxu0 %v399
        %v401 = vand.u32 %v168, 4294901760
        %402 = vmatpush.msra.mxu0 %v401
        %v403 = vand.u32 %v167, 4294901760
        %404 = vmatpush.msra.mxu0 %v403
        %v405 = vand.u32 %v166, 4294901760
        %406 = vmatpush.msra.mxu0 %v405
        %v407 = vand.u32 %v165, 4294901760
        %408 = vmatpush.msra.mxu0 %v407
        %v409 = vand.u32 %v164, 4294901760
        %v410 = vsub.f32 %v164, %v409
        %v411 = vand.u32 %v410, 4294901760
        %412 = vmatmul.f32.gmra.mxu0 %v411
        %v413 = vpop.f32.mrf.mxu0
        %v414 = vadd.f32 %v375, %v413
        %415 = vdwg.mxu0
        %v416 = vand.u32 %v180, 4294901760
        %v417 = vsub.f32 %v180, %v416
        %v418 = vand.u32 %v417, 4294901760
        %419 = vmatpush.msra.mxu0 %v418
        %v420 = vand.u32 %v179, 4294901760
        %v421 = vsub.f32 %v179, %v420
        %v422 = vand.u32 %v421, 4294901760
        %423 = vmatpush.msra.mxu0 %v422
        %v424 = vand.u32 %v178, 4294901760
        %v425 = vsub.f32 %v178, %v424
        %v426 = vand.u32 %v425, 4294901760
        %427 = vmatpush.msra.mxu0 %v426
        %v428 = vand.u32 %v177, 4294901760
        %v429 = vsub.f32 %v177, %v428
        %v430 = vand.u32 %v429, 4294901760
        %431 = vmatpush.msra.mxu0 %v430
        %v432 = vand.u32 %v176, 4294901760
        %v433 = vsub.f32 %v176, %v432
        %v434 = vand.u32 %v433, 4294901760
        %435 = vmatpush.msra.mxu0 %v434
        %v436 = vand.u32 %v175, 4294901760
        %v437 = vsub.f32 %v175, %v436
        %v438 = vand.u32 %v437, 4294901760
        %439 = vmatpush.msra.mxu0 %v438
        %v440 = vand.u32 %v174, 4294901760
        %v441 = vsub.f32 %v174, %v440
        %v442 = vand.u32 %v441, 4294901760
        %443 = vmatpush.msra.mxu0 %v442
        %v444 = vand.u32 %v173, 4294901760
        %v445 = vsub.f32 %v173, %v444
        %v446 = vand.u32 %v445, 4294901760
        %447 = vmatpush.msra.mxu0 %v446
        %v448 = vand.u32 %v172, 4294901760
        %v449 = vsub.f32 %v172, %v448
        %v450 = vand.u32 %v449, 4294901760
        %451 = vmatpush.msra.mxu0 %v450
        %v452 = vand.u32 %v171, 4294901760
        %v453 = vsub.f32 %v171, %v452
        %v454 = vand.u32 %v453, 4294901760
        %455 = vmatpush.msra.mxu0 %v454
        %v456 = vand.u32 %v170, 4294901760
        %v457 = vsub.f32 %v170, %v456
        %v458 = vand.u32 %v457, 4294901760
        %459 = vmatpush.msra.mxu0 %v458
        %v460 = vand.u32 %v169, 4294901760
        %v461 = vsub.f32 %v169, %v460
        %v462 = vand.u32 %v461, 4294901760
        %463 = vmatpush.msra.mxu0 %v462
        %v464 = vand.u32 %v168, 4294901760
        %v465 = vsub.f32 %v168, %v464
        %v466 = vand.u32 %v465, 4294901760
        %467 = vmatpush.msra.mxu0 %v466
        %v468 = vand.u32 %v167, 4294901760
        %v469 = vsub.f32 %v167, %v468
        %v470 = vand.u32 %v469, 4294901760
        %471 = vmatpush.msra.mxu0 %v470
        %v472 = vand.u32 %v166, 4294901760
        %v473 = vsub.f32 %v166, %v472
        %v474 = vand.u32 %v473, 4294901760
        %475 = vmatpush.msra.mxu0 %v474
        %v476 = vand.u32 %v165, 4294901760
        %v477 = vsub.f32 %v165, %v476
        %v478 = vand.u32 %v477, 4294901760
        %479 = vmatpush.msra.mxu0 %v478
        %v480 = vand.u32 %v164, 4294901760
        %481 = vmatmul.f32.gmra.mxu0 %v480
        %v482 = vpop.f32.mrf.mxu0
        %v483 = vadd.f32 %v414, %v482
        %484 = vdwg.mxu0
        %v485 = vand.u32 %v180, 4294901760
        %486 = vmatpush.msra.mxu0 %v485
        %v487 = vand.u32 %v179, 4294901760
        %488 = vmatpush.msra.mxu0 %v487
        %v489 = vand.u32 %v178, 4294901760
        %490 = vmatpush.msra.mxu0 %v489
        %v491 = vand.u32 %v177, 4294901760
        %492 = vmatpush.msra.mxu0 %v491
        %v493 = vand.u32 %v176, 4294901760
        %494 = vmatpush.msra.mxu0 %v493
        %v495 = vand.u32 %v175, 4294901760
        %496 = vmatpush.msra.mxu0 %v495
        %v497 = vand.u32 %v174, 4294901760
        %498 = vmatpush.msra.mxu0 %v497
        %v499 = vand.u32 %v173, 4294901760
        %500 = vmatpush.msra.mxu0 %v499
        %v501 = vand.u32 %v172, 4294901760
        %502 = vmatpush.msra.mxu0 %v501
        %v503 = vand.u32 %v171, 4294901760
        %504 = vmatpush.msra.mxu0 %v503
        %v505 = vand.u32 %v170, 4294901760
        %506 = vmatpush.msra.mxu0 %v505
        %v507 = vand.u32 %v169, 4294901760
        %508 = vmatpush.msra.mxu0 %v507
        %v509 = vand.u32 %v168, 4294901760
        %510 = vmatpush.msra.mxu0 %v509
        %v511 = vand.u32 %v167, 4294901760
        %512 = vmatpush.msra.mxu0 %v511
        %v513 = vand.u32 %v166, 4294901760
        %514 = vmatpush.msra.mxu0 %v513
        %v515 = vand.u32 %v165, 4294901760
        %516 = vmatpush.msra.mxu0 %v515
        %v517 = vand.u32 %v164, 4294901760
        %518 = vmatmul.f32.gmra.mxu0 %v517
        %v519 = vpop.f32.mrf.mxu0
        %v520 = vadd.f32 %v483, %v519
        %521 = vdwg.mxu0
        %522 = vst [vmem:[%s151] sm:$0xff] %v520
        %s523 = sand.u32 %s72, 1
        %s524 = scalar_lea.sflag [#allocation4], %s523
        %s525 = sand.u32 %s72, 1
        %s526 = smul.addr %s525, 8
        %s527 = scalar_lea.vmem [#allocation5], %s526
        // Predicated region
        $region33: #{tpu_custom_call.1} parent=27 // pred_check
          %p528 = pneg %p82
        $region34: #{tpu_custom_call.1} parent=27 // pred_check_branch
          %530 = sbr.rel (%p528) target = $region36
        $region35: #{tpu_custom_call.1} parent=27 // pred_region
          %532 = vsyncadd %s524, 0
          %s533 = smul.addr %s17, 8
          %s534 = scalar_lea.hbm %s2, %s533
          %s536 = sshll.u32 %s527, 4
          %s537 = int_to_ptr.vmem [resolvable:$true] %s536
          %s538 = sshll.u32 %s534, 4
          %s539 = int_to_ptr.hbm [resolvable:$true] %s538
          %541 = dma.vmem_to_hbm [thread:$0]  %s537, 128, %s539, %s524
        $region36: #{tpu_custom_call.1} parent=27 // pred_fallthru
          _
      $region28: #{tpu_custom_call.1} parent=5 // pred_fallthru
        _
      %p542 = scmp.le.s32.totalorder 2, %s12
      // Predicated region
      $region37: #{tpu_custom_call.1} parent=5 // pred_check
        %p543 = pneg %p542
      $region38: #{tpu_custom_call.1} parent=5 // pred_check_branch
        %545 = sbr.rel (%p543) target = $region40
      $region39: #{tpu_custom_call.1} parent=5 // pred_region
        %s546 = ssub.s32 %s12, 2
        // Predicated region
        $region41: #{tpu_custom_call.1} parent=39 // pred_check
          %p547 = pneg %p88
        $region42: #{tpu_custom_call.1} parent=39 // pred_check_branch
          %549 = sbr.rel (%p547) target = $region44
        $region43: #{tpu_custom_call.1} parent=39 // pred_region
          %s550 = sand.u32 %s73, 1
          %s551 = scalar_lea.sflag [#allocation4], %s550
          %s552 = sand.u32 %s73, 1
          %s553 = smul.addr %s552, 8
          %s554 = scalar_lea.vmem [#allocation5], %s553
          %556 = dma.done %s551, 128
        $region44: #{tpu_custom_call.1} parent=39 // pred_fallthru
          _
      $region40: #{tpu_custom_call.1} parent=5 // pred_fallthru
        _
    $region6: #{tpu_custom_call.1} parent=1 // loop_footer
      %s16 = sadd.s32 1, %s12
    $region7: #{tpu_custom_call.1} parent=1 // loop_footer_branch
      %11 = sbr.rel target = $region3
    $region8: #{tpu_custom_call.1} parent=1 // loop_exit
      _
    %557 = vsyncpa [#allocation3], 1
    %s558 = scalar_lea.sflag [#allocation3], 1
    %559 = vsyncpa %s558, 1
    %560 = vsyncpa [#allocation4], 1
    %s561 = scalar_lea.sflag [#allocation4], 1
    %562 = vsyncpa %s561, 1

</llo_original>
